<compile_context>
chip_gen: v5e
topology: v5e:2x2
jax: 0.10.0
libtpu: 0.0.40
codegen_flags: <defaults>
</compile_context>

<pallas_src>
import math

import jax
import jax.numpy as jnp
from jax.experimental import pallas as pl
from jax.experimental.pallas import tpu as pltpu

_MIB = 1024 * 1024


def _round_up(x, m):
    return ((x + m - 1) // m) * m


def _mlp_chain(h, w_refs, mxu_dtype, out_ref):
    """relu(h @ W1) -> ... -> h @ W_last, f32 accumulation on the MXU."""
    num_layers = len(w_refs)
    for li, w_ref in enumerate(w_refs):
        h = jnp.dot(h, w_ref[...], preferred_element_type=jnp.float32)
        if li != num_layers - 1:              # hidden layers: act = relu
            h = jnp.maximum(h, 0.0)
            if mxu_dtype is not None:
                h = h.astype(mxu_dtype)
        # last layer: act = identity, bias = None
    out_ref[...] = h.astype(out_ref.dtype)


def _make_vmem_table_kernel(num_layers, tm, mxu_dtype):
    """Path A: feature table resident in VMEM; per-row VMEM->VMEM gather,
    single aggregated wait, then the dense layer chain."""

    def kernel(idx_ref, feat_ref, *rest):
        w_refs = rest[:num_layers]
        out_ref = rest[num_layers]
        gbuf = rest[num_layers + 1]           # (tm, d0) VMEM scratch
        sem = rest[num_layers + 2]            # scalar DMA semaphore

        base = pl.program_id(0) * tm

        # Fast local gather: tm row copies, all signaling the same semaphore.
        @pl.loop(0, tm)
        def _(r):
            node = idx_ref[base + r]          # node index from SMEM (scalar prefetch)
            pltpu.make_async_copy(
                feat_ref.at[pl.ds(node, 1), :],
                gbuf.at[pl.ds(r, 1), :],
                sem,
            ).start()

        # ONE aggregated wait: descriptor byte-count == full (tm, d0) tile,
        # which equals the sum of the tm row copies signaled above.
        pltpu.make_async_copy(gbuf, gbuf, sem).wait()

        _mlp_chain(gbuf[...], w_refs, mxu_dtype, out_ref)

    return kernel


def _make_hbm_gather_kernel(num_layers, tm, mxu_dtype):
    """Path B (large tables): features stay in HBM; per-row DMA gather is
    double-buffered ACROSS grid steps and finished with one aggregated wait."""

    def kernel(idx_ref, feat_hbm, *rest):
        w_refs = rest[:num_layers]
        out_ref = rest[num_layers]
        gbuf = rest[num_layers + 1]           # (2, tm, d0) VMEM scratch
        sem = rest[num_layers + 2]            # (2,) DMA semaphores

        i = pl.program_id(0)
        nsteps = pl.num_programs(0)
        slot = i % 2

        def issue_gather(step, dst_slot):
            base = step * tm

            @pl.loop(0, tm)
            def _(r):
                node = idx_ref[base + r]
                pltpu.make_async_copy(
                    feat_hbm.at[pl.ds(node, 1), :],
                    gbuf.at[dst_slot, pl.ds(r, 1), :],
                    sem.at[dst_slot],
                ).start()

        # Prime slot 0 on the first step.
        @pl.when(i == 0)
        def _():
            issue_gather(0, 0)

        # Prefetch next tile's rows into the other slot (indices already in SMEM).
        @pl.when(i + 1 < nsteps)
        def _():
            issue_gather(i + 1, 1 - slot)

        # ONE aggregated wait for this slot: byte-count of a full (tm, d0) tile.
        pltpu.make_async_copy(gbuf.at[slot], gbuf.at[slot], sem.at[slot]).wait()

        _mlp_chain(gbuf[slot], w_refs, mxu_dtype, out_ref)

    return kernel


def encoder_forward(x_idx, features, weights, *, max_tile=256, mxu_dtype=None,
                    force_hbm_gather=False):
    """Encoder.forward for name='linear' (eval mode).

    x_idx:    int32 [B]            node indices
    features: f32   [nnodes, d0]   node feature matrix
    weights:  list of f32 [d_{i-1}, d_i]
    returns:  f32   [B, d_last]
    """
    num_layers = len(weights)
    assert num_layers >= 1
    nnodes, d0 = int(features.shape[0]), int(features.shape[1])
    B = int(x_idx.shape[0])

    # ---- Pad every layer's output dim (and the next layer's input dim) to a
    # lane multiple (128). relu(0)=0 and zero rows/cols contribute nothing, so
    # the padding propagates exactly; the final output is sliced back below. ----
    out_dims = [int(w.shape[1]) for w in weights]
    out_pads = [_round_up(d, 128) for d in out_dims]
    in_pads = [d0] + out_pads[:-1]
    weights_p = []
    for li, w in enumerate(weights):
        wi, wo = int(w.shape[0]), int(w.shape[1])
        wp = jnp.pad(w, ((0, in_pads[li] - wi), (0, out_pads[li] - wo)))
        if mxu_dtype is not None:             # pre-cast ONCE in the wrapper
            wp = wp.astype(mxu_dtype)
        weights_p.append(wp)
    n_pad = out_pads[-1]
    d_last = out_dims[-1]

    feats = features if mxu_dtype is None else features.astype(mxu_dtype)
    feat_isz = feats.dtype.itemsize

    # ---- Per-generation VMEM budget (v7x: 64 MiB physical; v5e/v6e: 128 MiB). --
    try:
        vmem_cap = int(pltpu.get_tpu_info().vmem_capacity_bytes)
    except Exception:
        vmem_cap = 64 * _MIB                  # conservative default (v7x-class)
    if vmem_cap <= 96 * _MIB:
        vmem_limit = min(48 * _MIB, max(vmem_cap - 16 * _MIB, 16 * _MIB))
    else:
        vmem_limit = 96 * _MIB
    budget = (vmem_limit * 3) // 4

    weight_bytes = sum(int(w.shape[0]) * int(w.shape[1]) * w.dtype.itemsize
                       for w in weights_p)
    table_bytes = nnodes * d0 * feat_isz
    use_vmem_table = (not force_hbm_gather) and (
        table_bytes <= min(4 * _MIB, budget // 4))

    # ---- Batch tile: capped for vreg pressure, >=2 tiles for big batches so
    # both v7x TensorCores get work, shrunk under the VMEM budget. -------------
    rb = _round_up(B, 8)
    tm = min(max_tile, rb)
    if use_vmem_table and rb >= 256:
        tm = min(tm, _round_up(-(-rb // 2), 8))
    tm = max(8, _round_up(tm, 8))

    max_width = max([d0] + out_pads)

    def footprint(t):
        fixed = 2 * weight_bytes                           # constant blocks still double-buffer
        if use_vmem_table:
            fixed += 2 * table_bytes
            gather = t * d0 * feat_isz                     # single gather scratch
        else:
            gather = 2 * t * d0 * feat_isz                 # cross-step double buffer
        out_bytes = 2 * t * n_pad * 4                      # output double buffer (f32)
        temps = 2 * t * max_width * 4                      # headroom for intermediate h
        return fixed + gather + out_bytes + temps

    while tm > 8 and footprint(tm) > budget:
        tm = max(8, _round_up(tm // 2, 8))

    b_pad = _round_up(B, tm)
    x_pad = x_idx.astype(jnp.int32)
    if b_pad != B:
        # Pad with node 0 (always in range) so padded rows do safe lookups; sliced off below.
        x_pad = jnp.pad(x_pad, (0, b_pad - B))
    grid = (b_pad // tm,)

    weight_specs = [pl.BlockSpec(tuple(w.shape), lambda i, idx: (0, 0))
                    for w in weights_p]
    if use_vmem_table:
        feat_spec = pl.BlockSpec((nnodes, d0), lambda i, idx: (0, 0))   # whole table in VMEM
        scratch = [pltpu.VMEM((tm, d0), feats.dtype),
                   pltpu.SemaphoreType.DMA(())]
        kernel = _make_vmem_table_kernel(num_layers, tm, mxu_dtype)
        dim_sem = ("parallel",)               # self-contained per step -> megacore-splittable
    else:
        feat_spec = pl.BlockSpec(memory_space=pl.ANY)                   # raw HBM ref
        scratch = [pltpu.VMEM((2, tm, d0), feats.dtype),
                   pltpu.SemaphoreType.DMA((2,))]
        kernel = _make_hbm_gather_kernel(num_layers, tm, mxu_dtype)
        dim_sem = ("arbitrary",)              # cross-step prefetch state must stay sequential

    in_specs = [feat_spec] + weight_specs
    out_specs = pl.BlockSpec((tm, n_pad), lambda i, idx: (i, 0))        # lane-dense output slab

    flops = 2 * b_pad * sum(int(w.shape[0]) * int(w.shape[1]) for w in weights_p)
    bytes_accessed = (b_pad * d0 * feat_isz + weight_bytes
                      + b_pad * n_pad * 4 + b_pad * 4)
    if use_vmem_table:
        bytes_accessed += table_bytes
    cost = pl.CostEstimate(flops=int(flops), transcendentals=0,
                           bytes_accessed=int(bytes_accessed))

    out = pl.pallas_call(
        kernel,
        out_shape=jax.ShapeDtypeStruct((b_pad, n_pad), jnp.float32),
        grid_spec=pltpu.PrefetchScalarGridSpec(
            num_scalar_prefetch=1,            # x_idx -> SMEM, visible in kernel & index_maps
            grid=grid,
            in_specs=in_specs,
            out_specs=out_specs,
            scratch_shapes=scratch,
        ),
        compiler_params=pltpu.CompilerParams(
            dimension_semantics=dim_sem,
            vmem_limit_bytes=int(vmem_limit),
        ),
        cost_estimate=cost,
    )(x_pad, feats, *weights_p)

    return out[:B, :d_last]


def xavier_uniform(key, shape):
    """torch.nn.init.xavier_uniform_ for a [fan_in, fan_out] weight."""
    fan_in, fan_out = shape
    bound = math.sqrt(6.0 / (fan_in + fan_out))
    return jax.random.uniform(key, shape, jnp.float32, -bound, bound)


def _reference(x_idx, features, weights):
    h = features[x_idx]
    for i, w in enumerate(weights):
        h = h @ w
        if i != len(weights) - 1:
            h = jnp.maximum(h, 0.0)
    return h


if __name__ == "__main__":
    key = jax.random.PRNGKey(0)

    # Module configuration (small, consistent with Encoder.__init__):
    #   features: [nnodes, dimensions[0]];  dimensions -> len-1 Linear layers.
    nnodes = 64
    dimensions = [32, 64, 16]
    batch = 8

    k_feat, k_idx, *k_ws = jax.random.split(key, 2 + len(dimensions) - 1)

    features = jax.random.normal(k_feat, (nnodes, dimensions[0]), jnp.float32)
    x_idx = jax.random.randint(k_idx, (batch,), 0, nnodes, jnp.int32)
    weights = [
        xavier_uniform(k_ws[i - 1], (dimensions[i - 1], dimensions[i]))
        for i in range(1, len(dimensions))
    ]

    # Test 1: VMEM-resident-table path, single tile.
    out = jax.block_until_ready(encoder_forward(x_idx, features, weights))
    ref = _reference(x_idx, features, weights)
    assert out.shape == (batch, dimensions[-1])
    assert jnp.allclose(out, ref, atol=1e-5, rtol=1e-5)

    # Test 2: VMEM-table path, multi-step ragged batch (padding + pipelining).
    k_idx2 = jax.random.fold_in(key, 7)
    batch2 = 37
    x_idx2 = jax.random.randint(k_idx2, (batch2,), 0, nnodes, jnp.int32)
    out2 = jax.block_until_ready(
        encoder_forward(x_idx2, features, weights, max_tile=16)
    )
    ref2 = _reference(x_idx2, features, weights)
    assert out2.shape == (batch2, dimensions[-1])
    assert jnp.allclose(out2, ref2, atol=1e-5, rtol=1e-5)

    # Test 3: large-table fallback path (HBM gather, cross-step double buffering).
    out3 = jax.block_until_ready(
        encoder_forward(x_idx2, features, weights, max_tile=16,
                        force_hbm_gather=True)
    )
    assert out3.shape == (batch2, dimensions[-1])
    assert jnp.allclose(out3, ref2, atol=1e-5, rtol=1e-5)

    # TODO(synk): training-mode dropout / sparse_inputs paths of Linear and the
    # name='none' nn.Embedding variant are not modelled (eval-mode 'linear'
    # forward only, matching the reference semantics used here).

    print("KERNEL_OK")
</pallas_src>

<mosaic_0001>
module attributes {stable_mosaic.version = 11 : i64} {
  func.func @kernel(%arg0: i32, %arg1: memref<8xi32, #tpu.memory_space<smem>>, %arg2: memref<64x32xf32, #tpu.memory_space<vmem>>, %arg3: memref<32x128xf32, #tpu.memory_space<vmem>>, %arg4: memref<128x128xf32, #tpu.memory_space<vmem>>, %arg5: memref<8x128xf32, #tpu.memory_space<vmem>>, %arg6: memref<8x32xf32, #tpu.memory_space<vmem>>, %arg7: memref<!tpu.dma_semaphore, #tpu.memory_space<semaphore_mem>>) attributes {dimension_semantics = [#tpu.dimension_semantics<parallel>], iteration_bounds = array<i64: 1>, scalar_prefetch = 1 : i64, scratch_operands = 2 : i64, tpu.core_type = #tpu.core_type<tc>, window_params = [{pipeline_mode = #tpu.pipeline_mode<synchronous>, transform_indices = @transform_0, window_bounds = array<i64: 64, 32>}, {pipeline_mode = #tpu.pipeline_mode<synchronous>, transform_indices = @transform_1, window_bounds = array<i64: 32, 128>}, {pipeline_mode = #tpu.pipeline_mode<synchronous>, transform_indices = @transform_2, window_bounds = array<i64: 128, 128>}, {transform_indices = @transform_3, window_bounds = array<i64: 8, 128>}]} {
    %c8_i32 = arith.constant 8 : i32
    %0 = arith.muli %arg0, %c8_i32 : i32
    %c0_i32 = arith.constant 0 : i32
    %c8_i32_0 = arith.constant 8 : i32
    %1 = arith.addi %c0_i32, %c8_i32_0 : i32
    %c1_i32 = arith.constant 1 : i32
    scf.for %arg8 = %c0_i32 to %1 step %c1_i32  : i32 {
      %c1_i32_11 = arith.constant 1 : i32
      %10 = arith.muli %arg8, %c1_i32_11 : i32
      %c0_i32_12 = arith.constant 0 : i32
      %11 = arith.addi %c0_i32_12, %10 : i32
      %12 = arith.addi %0, %11 : i32
      %13 = arith.index_cast %12 : i32 to index
      %14 = memref.load %arg1[%13] : memref<8xi32, #tpu.memory_space<smem>>
      %c0_i32_13 = arith.constant 0 : i32
      %15 = tpu.memref_slice %arg2[%14, %c0_i32_13] : memref<64x32xf32, #tpu.memory_space<vmem>> -> memref<1x32xf32, #tpu.memory_space<vmem>>
      %c0_i32_14 = arith.constant 0 : i32
      %16 = tpu.memref_slice %arg6[%11, %c0_i32_14] : memref<8x32xf32, #tpu.memory_space<vmem>> -> memref<1x32xf32, #tpu.memory_space<vmem>>
      tpu.enqueue_dma source(%15 : memref<1x32xf32, #tpu.memory_space<vmem>>) target(%16 : memref<1x32xf32, #tpu.memory_space<vmem>>) target_semaphore(%arg7 : memref<!tpu.dma_semaphore, #tpu.memory_space<semaphore_mem>>)
    }
    %c8_i32_1 = arith.constant 8 : i32
    tpu.wait_dma2 semaphore(%arg7 : memref<!tpu.dma_semaphore, #tpu.memory_space<semaphore_mem>>) src(%arg6 : memref<8x32xf32, #tpu.memory_space<vmem>>) dst(%arg6 : memref<8x32xf32, #tpu.memory_space<vmem>>)
    %c0 = arith.constant 0 : index
    %c0_2 = arith.constant 0 : index
    %2 = vector.load %arg6[%c0, %c0_2] : memref<8x32xf32, #tpu.memory_space<vmem>>, vector<8x32xf32>
    %c0_3 = arith.constant 0 : index
    %c0_4 = arith.constant 0 : index
    %3 = vector.load %arg3[%c0_3, %c0_4] : memref<32x128xf32, #tpu.memory_space<vmem>>, vector<32x128xf32>
    %cst = arith.constant dense<0.000000e+00> : vector<8x128xf32>
    %4 = tpu.matmul %2, %3, %cst {dimension_numbers = #tpu.dot_dimension_numbers<[1], [0], [0], [1], [0, 0, 1, 1], [], []>} : vector<8x32xf32>, vector<32x128xf32>, vector<8x128xf32> -> vector<8x128xf32>
    %cst_5 = arith.constant 0.000000e+00 : f32
    %5 = vector.broadcast %cst_5 : f32 to vector<8x128xf32>
    %6 = arith.maximumf %4, %5 : vector<8x128xf32>
    %c0_6 = arith.constant 0 : index
    %c0_7 = arith.constant 0 : index
    %7 = vector.load %arg4[%c0_6, %c0_7] : memref<128x128xf32, #tpu.memory_space<vmem>>, vector<128x128xf32>
    %cst_8 = arith.constant dense<0.000000e+00> : vector<8x128xf32>
    %8 = tpu.matmul %6, %7, %cst_8 {dimension_numbers = #tpu.dot_dimension_numbers<[1], [0], [0], [1], [0, 0, 1, 1], [], []>} : vector<8x128xf32>, vector<128x128xf32>, vector<8x128xf32> -> vector<8x128xf32>
    %c0_9 = arith.constant 0 : index
    %c0_10 = arith.constant 0 : index
    %9 = vector.load %arg5[%c0_9, %c0_10] : memref<8x128xf32, #tpu.memory_space<vmem>>, vector<8x128xf32>
    tpu.vector_store %arg5[%c0_9, %c0_10], %8 {strides = array<i32>} : memref<8x128xf32, #tpu.memory_space<vmem>>, vector<8x128xf32>,
    return
  }
  func.func @transform_0(%arg0: i32, %arg1: memref<8xi32, #tpu.memory_space<smem>>) -> (i32, i32) {
    %c0_i32 = arith.constant 0 : i32
    %c0_i32_0 = arith.constant 0 : i32
    %c0_i32_1 = arith.constant 0 : i32
    return %c0_i32, %c0_i32_0 : i32, i32
  }
  func.func @transform_1(%arg0: i32, %arg1: memref<8xi32, #tpu.memory_space<smem>>) -> (i32, i32) {
    %c0_i32 = arith.constant 0 : i32
    %c0_i32_0 = arith.constant 0 : i32
    %c0_i32_1 = arith.constant 0 : i32
    return %c0_i32, %c0_i32_0 : i32, i32
  }
  func.func @transform_2(%arg0: i32, %arg1: memref<8xi32, #tpu.memory_space<smem>>) -> (i32, i32) {
    %c0_i32 = arith.constant 0 : i32
    %c0_i32_0 = arith.constant 0 : i32
    %c0_i32_1 = arith.constant 0 : i32
    return %c0_i32, %c0_i32_0 : i32, i32
  }
  func.func @transform_3(%arg0: i32, %arg1: memref<8xi32, #tpu.memory_space<smem>>) -> (i32, i32) {
    %c0_i32 = arith.constant 0 : i32
    %c0_i32_0 = arith.constant 0 : i32
    return %arg0, %c0_i32 : i32, i32
  }
}

</mosaic_0001>

<llo_original>
// kernel: tpu_custom_call.1
$region0: #{tpu_custom_call.1}
  #allocation0 [shape = 'u32[]', space=smem, size = 0x4, offset = 0x4, fixed_abs, tag = 'smem constant byte address 0x4 - core index']
  #allocation1 [shape = 'u32[72,128]{1,0:T(1,128)}', space=vmem, size = 0x9000, scoped, tag = 'internal scratch']
  #allocation2 [shape = 'f32[8,32]{1,0:T(8,128)}', space=vmem, size = 0x1000, scoped, tag = 'scratch operand']
  #allocation3 [shape = 's32[1]{0}', space=sflag, size = 0x4, scoped, tag = 'scratch operand']
  #allocation4 [shape = 's32[1]{0}', space=sflag, size = 0x4, scoped, tag = 'scoped memory for tpu_custom_call.1']
  #allocation5 [shape = 'u8[512]{0}', space=smem, size = 0x200, scoped, tag = 'prefetched SMEM operand 0']
  #allocation10 [shape = 's32[]', space=sflag, size = 0x4, offset = 0, fixed_abs, tag = 'sflag constant byte address 0x0 - dummy sync flag']
  %s0 = inlined_call_operand.vmem [shape: s32[8], index: 0, kind: input, shape index: {}]
  %s1 = inlined_call_operand.vmem [shape: f32[64,32], index: 1, kind: input, shape index: {}]
  %s2 = inlined_call_operand.vmem [shape: f32[32,128], index: 2, kind: input, shape index: {}]
  %s3 = inlined_call_operand.hbm [shape: f32[128,128], index: 3, kind: input, shape index: {}]
  %s4 = inlined_call_operand.hbm [shape: f32[8,128], index: 4, kind: output, shape index: {}]
  %s5 = sld [smem:[#allocation0]]
  $region63: #{tpu_custom_call.1} parent=0
    _
  %s7 = ssub.s32 1, %s5
  %s8 = scalar_select 0, %s7, %s5
  %s10 = sshll.u32 %s0, 4
  %s11 = int_to_ptr.vmem [resolvable:$true] %s10
  %13 = dma.vmem_to_smem %s11, 16, [#allocation5], [#allocation4]
  %15 = dma.done [#allocation4], 16
  %16 = sfence
  $region1: #{tpu_custom_call.1} parent=0
    #allocation6 [shape = 'u8[65536]{0}', space=vmem, size = 0x10000, scoped, tag = 'input window, operand 3, single buffered']
    #allocation7 [shape = 's32[1]{0}', space=sflag, size = 0x4, scoped, tag = 'scoped memory for tpu_custom_call.1']
    #allocation8 [shape = 's32[1]{0}', space=sflag, size = 0x4, scoped, tag = 'scoped memory for tpu_custom_call.1']
    #allocation9 [shape = 'u8[4096]{0}', space=vmem, size = 0x1000, scoped, tag = 'output window, operand 0, single buffered']
    %17 = vsyncpa [#allocation7], 0
    %18 = vsyncpa [#allocation8], 0
    // Predicated region
    $region2: #{tpu_custom_call.1} parent=1 // pred_check
      _
    $region3: #{tpu_custom_call.1} parent=1 // pred_check_branch
      %20 = sbr.rel (0) target = $region5
    $region4: #{tpu_custom_call.1} parent=1 // pred_region
      _
    $region5: #{tpu_custom_call.1} parent=1 // pred_fallthru
      _
    // Predicated region
    $region6: #{tpu_custom_call.1} parent=1 // pred_check
      _
    $region7: #{tpu_custom_call.1} parent=1 // pred_check_branch
      %22 = sbr.rel (0) target = $region9
    $region8: #{tpu_custom_call.1} parent=1 // pred_region
      _
    $region9: #{tpu_custom_call.1} parent=1 // pred_fallthru
      _
    // Predicated region
    $region10: #{tpu_custom_call.1} parent=1 // pred_check
      _
    $region11: #{tpu_custom_call.1} parent=1 // pred_check_branch
      %24 = sbr.rel (0) target = $region13
    $region12: #{tpu_custom_call.1} parent=1 // pred_region
      %26 = vsyncadd [#allocation7], 0
      %s27 = sshll.u32 %s3, 4
      %s28 = int_to_ptr.hbm [resolvable:$true] %s27
      %s29 = sshll.u32 [#allocation6], 4
      %s30 = int_to_ptr.vmem [resolvable:$true] %s29
      %35 = dma.hbm_to_vmem [thread:$0]  %s28, 2048, %s30, [#allocation7], 128, 128, 8
    $region13: #{tpu_custom_call.1} parent=1 // pred_fallthru
      _
    // Predicated region
    $region14: #{tpu_custom_call.1} parent=1 // pred_check
      _
    $region15: #{tpu_custom_call.1} parent=1 // pred_check_branch
      %37 = sbr.rel (0) target = $region17
    $region16: #{tpu_custom_call.1} parent=1 // pred_region
      %39 = dma.done [#allocation7], 2048
    $region17: #{tpu_custom_call.1} parent=1 // pred_fallthru
      _
    %s40 = smul.u32 0, 8
    loop: start=0, step=1, limit=8
    $region18: #{tpu_custom_call.1} parent=1 // loop_pre_header
      _
    $region19: #{tpu_custom_call.1} parent=1 // loop_header
      %s42 = sphi 0, %s46
      %p43 = scmp.ge.s32.totalorder %s42, 8
    $region20: #{tpu_custom_call.1} parent=1 // loop_header_branch
      %45 = sbr.rel (%p43) target = $region24
    $region21: #{tpu_custom_call.1} parent=1 // loop_body
      %s47 = sadd.s32 %s40, %s42
      %s48 = sld [smem:[#allocation5 + %s47]]
      %s49 = scalar_lea.vmem %s1, %s48
      %s50 = scalar_lea.vmem [#allocation2], %s42
      // Predicated region
      $region25: #{tpu_custom_call.1} parent=21 // pred_check
        _
      $region26: #{tpu_custom_call.1} parent=21 // pred_check_branch
        %52 = sbr.rel target = $region28
      $region27: #{tpu_custom_call.1} parent=21 // pred_region
        // Predicated region
        $region40: #{tpu_custom_call.1} parent=27 // pred_check
          _
        $region41: #{tpu_custom_call.1} parent=27 // pred_check_branch
          %68 = sbr.rel (0) target = $region43
        $region42: #{tpu_custom_call.1} parent=27 // pred_region
          %s70 = ssub.s32 2, 1
          loop: start=0, step=1, limit=1
          $region44: #{tpu_custom_call.1} parent=42 // loop_pre_header
            _
          $region45: #{tpu_custom_call.1} parent=42 // loop_header
            %s72 = sphi 0, %s76
            %p73 = scmp.ge.s32.totalorder %s72, 1
            %s77 = sphi %s49, %s49
            %s78 = sphi %s50, %s50
          $region46: #{tpu_custom_call.1} parent=42 // loop_header_branch
            %75 = sbr.rel (%p73) target = $region50
          $region47: #{tpu_custom_call.1} parent=42 // loop_body
            %v79 = vld [vmem:[%s77] sm:%s70]
            %80 = vst [vmem:[%s78] sm:%s70] %v79
          $region48: #{tpu_custom_call.1} parent=42 // loop_footer
            %s76 = sadd.s32 1, %s72
          $region49: #{tpu_custom_call.1} parent=42 // loop_footer_branch
            %71 = sbr.rel target = $region45
          $region50: #{tpu_custom_call.1} parent=42 // loop_exit
            _
        $region43: #{tpu_custom_call.1} parent=27 // pred_fallthru
          _
      $region28: #{tpu_custom_call.1} parent=21 // pred_fallthru
        _
      // Predicated region
      $region29: #{tpu_custom_call.1} parent=21 // pred_check
        _
      $region30: #{tpu_custom_call.1} parent=21 // pred_check_branch
        %54 = sbr.rel (0) target = $region32
      $region31: #{tpu_custom_call.1} parent=21 // pred_region
        %s56 = ssub.s32 2, 1
        loop: start=0, step=1, limit=1
        $region33: #{tpu_custom_call.1} parent=31 // loop_pre_header
          _
        $region34: #{tpu_custom_call.1} parent=31 // loop_header
          %s58 = sphi 0, %s62
          %p59 = scmp.ge.s32.totalorder %s58, 1
          %s63 = sphi %s49, %s49
          %s64 = sphi %s50, %s50
        $region35: #{tpu_custom_call.1} parent=31 // loop_header_branch
          %61 = sbr.rel (%p59) target = $region39
        $region36: #{tpu_custom_call.1} parent=31 // loop_body
          %v65 = vld [vmem:[%s63] sm:%s56]
          %66 = vst [vmem:[%s64] sm:%s56] %v65
        $region37: #{tpu_custom_call.1} parent=31 // loop_footer
          %s62 = sadd.s32 1, %s58
        $region38: #{tpu_custom_call.1} parent=31 // loop_footer_branch
          %57 = sbr.rel target = $region34
        $region39: #{tpu_custom_call.1} parent=31 // loop_exit
          _
      $region32: #{tpu_custom_call.1} parent=21 // pred_fallthru
        _
      // Predicated region
      $region51: #{tpu_custom_call.1} parent=21 // pred_check
        _
      $region52: #{tpu_custom_call.1} parent=21 // pred_check_branch
        %83 = sbr.rel (0) target = $region54
      $region53: #{tpu_custom_call.1} parent=21 // pred_region
        %84 = vsyncadd [#allocation3], 16
      $region54: #{tpu_custom_call.1} parent=21 // pred_fallthru
        _
    $region22: #{tpu_custom_call.1} parent=1 // loop_footer
      %s46 = sadd.s32 1, %s42
    $region23: #{tpu_custom_call.1} parent=1 // loop_footer_branch
      %41 = sbr.rel target = $region19
    $region24: #{tpu_custom_call.1} parent=1 // loop_exit
      _
    %s85 = smul.u32 8, 1
    %s86 = sshll.u32 %s85, 4
    %87 = dma.done [#allocation3], %s86
    %v88 = vld [vmem:[#allocation2] sm:$0xff]
    %v89 = vld [vmem:[%s2] sm:$0xff]
    %v90 = vld [vmem:[%s2 + $0x8] sm:$0xff]
    %v91 = vld [vmem:[%s2 + $0x10] sm:$0xff]
    %v92 = vld [vmem:[%s2 + $0x18] sm:$0xff]
    %vm93 = vcmask 261120
    %v95 = vsel %vm93, %v88, 0
    %97 = vmatpush.msra.mxu0 0.0
    %98 = vmatpush.msra.mxu0 0.0
    %99 = vmatpush.msra.mxu0 0.0
    %100 = vmatpush.msra.mxu0 0.0
    %101 = vmatpush.msra.mxu0 0.0
    %102 = vmatpush.msra.mxu0 0.0
    %103 = vmatpush.msra.mxu0 0.0
    %104 = vmatpush.msra.mxu0 0.0
    %105 = vmatpush.msra.mxu0 0.0
    %106 = vmatpush.msra.mxu0 0.0
    %107 = vmatpush.msra.mxu0 0.0
    %108 = vmatpush.msra.mxu0 0.0
    %109 = vmatpush.msra.mxu0 %v92
    %110 = vmatpush.msra.mxu0 %v91
    %111 = vmatpush.msra.mxu0 %v90
    %112 = vmatpush.msra.mxu0 %v89
    %113 = vmatmul.f32.gmra.mxu0 %v95
    %v114 = vpop.f32.mrf.mxu0
    %v115 = vadd.f32 0.0, %v114
    %116 = vdwg.mxu0
    %v117 = vmax.f32 %v115, 0.0
    %v118 = vld [vmem:[#allocation6] sm:$0xff]
    %v119 = vld [vmem:[#allocation6 + $0x8] sm:$0xff]
    %v120 = vld [vmem:[#allocation6 + $0x10] sm:$0xff]
    %v121 = vld [vmem:[#allocation6 + $0x18] sm:$0xff]
    %v122 = vld [vmem:[#allocation6 + $0x20] sm:$0xff]
    %v123 = vld [vmem:[#allocation6 + $0x28] sm:$0xff]
    %v124 = vld [vmem:[#allocation6 + $0x30] sm:$0xff]
    %v125 = vld [vmem:[#allocation6 + $0x38] sm:$0xff]
    %v126 = vld [vmem:[#allocation6 + $0x40] sm:$0xff]
    %v127 = vld [vmem:[#allocation6 + $0x48] sm:$0xff]
    %v128 = vld [vmem:[#allocation6 + $0x50] sm:$0xff]
    %v129 = vld [vmem:[#allocation6 + $0x58] sm:$0xff]
    %v130 = vld [vmem:[#allocation6 + $0x60] sm:$0xff]
    %v131 = vld [vmem:[#allocation6 + $0x68] sm:$0xff]
    %v132 = vld [vmem:[#allocation6 + $0x70] sm:$0xff]
    %v133 = vld [vmem:[#allocation6 + $0x78] sm:$0xff]
    %134 = vmatpush.msra.mxu0 %v133
    %135 = vmatpush.msra.mxu0 %v132
    %136 = vmatpush.msra.mxu0 %v131
    %137 = vmatpush.msra.mxu0 %v130
    %138 = vmatpush.msra.mxu0 %v129
    %139 = vmatpush.msra.mxu0 %v128
    %140 = vmatpush.msra.mxu0 %v127
    %141 = vmatpush.msra.mxu0 %v126
    %142 = vmatpush.msra.mxu0 %v125
    %143 = vmatpush.msra.mxu0 %v124
    %144 = vmatpush.msra.mxu0 %v123
    %145 = vmatpush.msra.mxu0 %v122
    %146 = vmatpush.msra.mxu0 %v121
    %147 = vmatpush.msra.mxu0 %v120
    %148 = vmatpush.msra.mxu0 %v119
    %149 = vmatpush.msra.mxu0 %v118
    %150 = vmatmul.f32.gmra.mxu0 %v117
    %v151 = vpop.f32.mrf.mxu0
    %v152 = vadd.f32 0.0, %v151
    %153 = vdwg.mxu0
    %154 = vst [vmem:[#allocation9] sm:$0xff] %v152
    // Predicated region
    $region55: #{tpu_custom_call.1} parent=1 // pred_check
      _
    $region56: #{tpu_custom_call.1} parent=1 // pred_check_branch
      %156 = sbr.rel (0) target = $region58
    $region57: #{tpu_custom_call.1} parent=1 // pred_region
      %158 = vsyncadd [#allocation8], 0
      %s160 = sshll.u32 [#allocation9], 4
      %s161 = int_to_ptr.vmem [resolvable:$true] %s160
      %s162 = sshll.u32 %s4, 4
      %s163 = int_to_ptr.hbm [resolvable:$true] %s162
      %165 = dma.vmem_to_hbm [thread:$0]  %s161, 128, %s163, [#allocation8]
    $region58: #{tpu_custom_call.1} parent=1 // pred_fallthru
      _
    // Predicated region
    $region59: #{tpu_custom_call.1} parent=1 // pred_check
      _
    $region60: #{tpu_custom_call.1} parent=1 // pred_check_branch
      %167 = sbr.rel (0) target = $region62
    $region61: #{tpu_custom_call.1} parent=1 // pred_region
      %169 = dma.done [#allocation8], 128
    $region62: #{tpu_custom_call.1} parent=1 // pred_fallthru
      _
    %170 = vsyncpa [#allocation7], 1
    %171 = vsyncpa [#allocation8], 1
  %172 = vsyncmov [#allocation3]
  %s173 = vpop.sfrf %172
  %p174 = scmp.eq.s32.totalorder %s173, 0
  %p175 = pneg %p174
  %177 = shalt.err (%p175)

</llo_original>
